<compile_context>
chip_gen: v7x
topology: tpu7x:2x2x1
jax: 0.10.0
libtpu: 0.0.40
codegen_flags: <defaults>
</compile_context>

<pallas_src>
import math

import jax
import jax.numpy as jnp
import numpy as np
from jax import lax
from jax.experimental import pallas as pl
from jax.experimental.pallas import tpu as pltpu

SQRT3 = math.sqrt(3.0)
SQRT5 = math.sqrt(5.0)
SQRT15 = math.sqrt(15.0)
SH_DIM = 9  # lmax = 2  ->  1 + 3 + 5
LANE = 128


def _sh_edge_kernel(src_ref, dst_ref, sh_ref, vec_ref):
    """src_ref/dst_ref: (3, R, 128) VMEM; sh_ref: (9, R, 128); vec_ref: (3, R, 128)."""
    # Dense (R, 128) slabs per component — full vreg utilization.
    x = dst_ref[0] - src_ref[0]
    y = dst_ref[1] - src_ref[1]
    z = dst_ref[2] - src_ref[2]

    # Raw edge vectors (reused by the caller for data['edge_vectors']).
    vec_ref[0] = x
    vec_ref[1] = y
    vec_ref[2] = z

    # normalize=True  ->  torch.nn.functional.normalize semantics.
    # eps on the squared norm (1e-24) is equivalent to eps=1e-12 on the norm.
    inv = lax.rsqrt(jnp.maximum(x * x + y * y + z * z, 1e-24))
    xn = x * inv
    yn = y * inv
    zn = z * inv

    x2 = xn * xn
    y2 = yn * yn
    z2 = zn * zn

    # e3nn _spherical_harmonics polynomials ('norm' base) scaled by sqrt(2l+1)
    # for normalization='component'.  Direct per-component stores (plain vst).
    sh_ref[0] = jnp.ones_like(xn)                      # l=0
    sh_ref[1] = SQRT3 * xn                             # l=1
    sh_ref[2] = SQRT3 * yn
    sh_ref[3] = SQRT3 * zn
    sh_ref[4] = SQRT15 * xn * zn                       # l=2
    sh_ref[5] = SQRT15 * xn * yn
    sh_ref[6] = SQRT5 * (y2 - 0.5 * (x2 + z2))
    sh_ref[7] = SQRT15 * yn * zn
    sh_ref[8] = (SQRT15 / 2.0) * (z2 - x2)


def spherical_harmonics_edges_pallas(src_cm, dst_cm, *, max_tile_rows=512):
    """src_cm, dst_cm: component-major (3, E) float32 gathered positions.

    Returns (edge_sh (E, 9), edge_vec (E, 3)) float32.

    max_tile_rows=512 -> 64K edges / grid step (~9 MiB live with double
    buffering): safely under the 32 MiB scoped-VMEM default on all of
    v5e/v6e/v7x.  On v5e/v6e this could be raised further.
    """
    E = src_cm.shape[1]
    rows = max(1, (E + LANE - 1) // LANE)

    if rows <= max_tile_rows:
        tile_rows = rows                      # single tile: block == full dim
        rows_pad = rows
    else:
        tile_rows = max_tile_rows             # multiple of 8 -> valid sublane tiling
        rows_pad = ((rows + tile_rows - 1) // tile_rows) * tile_rows

    e_pad = rows_pad * LANE

    def to_tiles(a):  # (3, E) -> (3, rows_pad, 128)
        a = a.astype(jnp.float32)
        a = jnp.pad(a, ((0, 0), (0, e_pad - E)))
        return a.reshape(3, rows_pad, LANE)

    src_t = to_tiles(src_cm)
    dst_t = to_tiles(dst_cm)

    grid = (rows_pad // tile_rows,)
    sh_t, vec_t = pl.pallas_call(
        _sh_edge_kernel,
        out_shape=(
            jax.ShapeDtypeStruct((SH_DIM, rows_pad, LANE), jnp.float32),
            jax.ShapeDtypeStruct((3, rows_pad, LANE), jnp.float32),
        ),
        grid=grid,
        in_specs=[
            pl.BlockSpec((3, tile_rows, LANE), lambda i: (0, i, 0)),
            pl.BlockSpec((3, tile_rows, LANE), lambda i: (0, i, 0)),
        ],
        out_specs=[
            pl.BlockSpec((SH_DIM, tile_rows, LANE), lambda i: (0, i, 0)),
            pl.BlockSpec((3, tile_rows, LANE), lambda i: (0, i, 0)),
        ],
        compiler_params=pltpu.CompilerParams(
            dimension_semantics=("parallel",),
        ),
    )(src_t, dst_t)

    edge_sh = sh_t.reshape(SH_DIM, e_pad)[:, :E].T    # (E, 9)
    edge_vec = vec_t.reshape(3, e_pad)[:, :E].T       # (E, 3)
    return edge_sh, edge_vec


def spherical_harmonic_edge_attrs_forward(data):
    """Mirror of SphericalHarmonicEdgeAttrs.forward for the non-PBC case.

    data: dict with
        'pos'        : (N, 3) float32 atom positions
        'edge_index' : (2, E) int32   [source; target] indices
    Adds 'edge_vectors' and 'edge_attrs' keys and returns data.
    """
    pos = data["pos"]
    edge_index = data["edge_index"]

    # Component-major gather: (3, N) transpose is tiny, and take(axis=1) yields
    # (3, E) directly — no (E, 3) intermediates / extra HBM transposes.
    pos_cm = pos.astype(jnp.float32).T                 # (3, N)
    src_cm = jnp.take(pos_cm, edge_index[0], axis=1)   # (3, E)  gather = glue
    dst_cm = jnp.take(pos_cm, edge_index[1], axis=1)   # (3, E)

    edge_sh, edge_vec = spherical_harmonics_edges_pallas(src_cm, dst_cm)

    data = dict(data)
    data["edge_vectors"] = edge_vec
    data["edge_attrs"] = edge_sh
    return data


def _reference_sh(pos_src, pos_dst):
    """Pure-JAX reference replicating the e3nn lmax=2 'component' convention."""
    v = (pos_dst - pos_src).astype(jnp.float32)
    norm = jnp.linalg.norm(v, axis=-1, keepdims=True)
    v = v / jnp.maximum(norm, 1e-12)
    x, y, z = v[:, 0], v[:, 1], v[:, 2]
    return jnp.stack(
        [
            jnp.ones_like(x),
            SQRT3 * x,
            SQRT3 * y,
            SQRT3 * z,
            SQRT15 * x * z,
            SQRT15 * x * y,
            SQRT5 * (y * y - 0.5 * (x * x + z * z)),
            SQRT15 * y * z,
            (SQRT15 / 2.0) * (z * z - x * x),
        ],
        axis=-1,
    )


if __name__ == "__main__":
    key = jax.random.PRNGKey(0)
    k_pos, k_src, k_dst = jax.random.split(key, 3)

    n_atoms = 16
    n_edges = 96
    pos = jax.random.normal(k_pos, (n_atoms, 3), dtype=jnp.float32)
    edge_index = jnp.stack(
        [
            jax.random.randint(k_src, (n_edges,), 0, n_atoms, dtype=jnp.int32),
            jax.random.randint(k_dst, (n_edges,), 0, n_atoms, dtype=jnp.int32),
        ],
        axis=0,
    )

    data = {"pos": pos, "edge_index": edge_index}
    out = spherical_harmonic_edge_attrs_forward(data)
    edge_sh = jax.block_until_ready(out["edge_attrs"])
    edge_vec = jax.block_until_ready(out["edge_vectors"])

    assert edge_sh.shape == (n_edges, SH_DIM)
    assert edge_vec.shape == (n_edges, 3)

    pos_src = jnp.take(pos, edge_index[0], axis=0)
    pos_dst = jnp.take(pos, edge_index[1], axis=0)
    ref_sh = _reference_sh(pos_src, pos_dst)
    ref_vec = pos_dst - pos_src

    # rsqrt-based normalization -> slightly loosened tolerance vs exact sqrt/div.
    np.testing.assert_allclose(np.asarray(edge_sh), np.asarray(ref_sh), rtol=1e-4, atol=1e-5)
    np.testing.assert_allclose(np.asarray(edge_vec), np.asarray(ref_vec), rtol=1e-5, atol=1e-6)

    print("KERNEL_OK")
</pallas_src>

<mosaic_0001>
module attributes {stable_mosaic.version = 11 : i64} {
  func.func @_sh_edge_kernel(%arg0: i32, %arg1: memref<3x1x128xf32, #tpu.memory_space<vmem>>, %arg2: memref<3x1x128xf32, #tpu.memory_space<vmem>>, %arg3: memref<9x1x128xf32, #tpu.memory_space<vmem>>, %arg4: memref<3x1x128xf32, #tpu.memory_space<vmem>>) attributes {dimension_semantics = [#tpu.dimension_semantics<parallel>], iteration_bounds = array<i64: 1>, scalar_prefetch = 0 : i64, scratch_operands = 0 : i64, tpu.core_type = #tpu.core_type<tc>, window_params = [{transform_indices = @transform_0, window_bounds = array<i64: 3, 1, 128>}, {transform_indices = @transform_1, window_bounds = array<i64: 3, 1, 128>}, {transform_indices = @transform_2, window_bounds = array<i64: 9, 1, 128>}, {transform_indices = @transform_3, window_bounds = array<i64: 3, 1, 128>}]} {
    %c0 = arith.constant 0 : index
    %c0_0 = arith.constant 0 : index
    %c0_1 = arith.constant 0 : index
    %0 = vector.load %arg2[%c0, %c0_0, %c0_1] : memref<3x1x128xf32, #tpu.memory_space<vmem>>, vector<1x1x128xf32>
    %1 = vector.shape_cast %0 : vector<1x1x128xf32> to vector<1x128xf32>
    %c0_2 = arith.constant 0 : index
    %c0_3 = arith.constant 0 : index
    %c0_4 = arith.constant 0 : index
    %2 = vector.load %arg1[%c0_2, %c0_3, %c0_4] : memref<3x1x128xf32, #tpu.memory_space<vmem>>, vector<1x1x128xf32>
    %3 = vector.shape_cast %2 : vector<1x1x128xf32> to vector<1x128xf32>
    %4 = arith.subf %1, %3 : vector<1x128xf32>
    %c1 = arith.constant 1 : index
    %c0_5 = arith.constant 0 : index
    %c0_6 = arith.constant 0 : index
    %5 = vector.load %arg2[%c1, %c0_5, %c0_6] : memref<3x1x128xf32, #tpu.memory_space<vmem>>, vector<1x1x128xf32>
    %6 = vector.shape_cast %5 : vector<1x1x128xf32> to vector<1x128xf32>
    %c1_7 = arith.constant 1 : index
    %c0_8 = arith.constant 0 : index
    %c0_9 = arith.constant 0 : index
    %7 = vector.load %arg1[%c1_7, %c0_8, %c0_9] : memref<3x1x128xf32, #tpu.memory_space<vmem>>, vector<1x1x128xf32>
    %8 = vector.shape_cast %7 : vector<1x1x128xf32> to vector<1x128xf32>
    %9 = arith.subf %6, %8 : vector<1x128xf32>
    %c2 = arith.constant 2 : index
    %c0_10 = arith.constant 0 : index
    %c0_11 = arith.constant 0 : index
    %10 = vector.load %arg2[%c2, %c0_10, %c0_11] : memref<3x1x128xf32, #tpu.memory_space<vmem>>, vector<1x1x128xf32>
    %11 = vector.shape_cast %10 : vector<1x1x128xf32> to vector<1x128xf32>
    %c2_12 = arith.constant 2 : index
    %c0_13 = arith.constant 0 : index
    %c0_14 = arith.constant 0 : index
    %12 = vector.load %arg1[%c2_12, %c0_13, %c0_14] : memref<3x1x128xf32, #tpu.memory_space<vmem>>, vector<1x1x128xf32>
    %13 = vector.shape_cast %12 : vector<1x1x128xf32> to vector<1x128xf32>
    %14 = arith.subf %11, %13 : vector<1x128xf32>
    %c0_15 = arith.constant 0 : index
    %c0_16 = arith.constant 0 : index
    %c0_17 = arith.constant 0 : index
    %15 = vector.load %arg4[%c0_15, %c0_16, %c0_17] : memref<3x1x128xf32, #tpu.memory_space<vmem>>, vector<1x1x128xf32>
    %16 = vector.shape_cast %15 : vector<1x1x128xf32> to vector<1x128xf32>
    %17 = vector.shape_cast %4 : vector<1x128xf32> to vector<1x1x128xf32>
    tpu.vector_store %arg4[%c0_15, %c0_16, %c0_17], %17 {strides = array<i32>} : memref<3x1x128xf32, #tpu.memory_space<vmem>>, vector<1x1x128xf32>,
    %c1_18 = arith.constant 1 : index
    %c0_19 = arith.constant 0 : index
    %c0_20 = arith.constant 0 : index
    %18 = vector.load %arg4[%c1_18, %c0_19, %c0_20] : memref<3x1x128xf32, #tpu.memory_space<vmem>>, vector<1x1x128xf32>
    %19 = vector.shape_cast %18 : vector<1x1x128xf32> to vector<1x128xf32>
    %20 = vector.shape_cast %9 : vector<1x128xf32> to vector<1x1x128xf32>
    tpu.vector_store %arg4[%c1_18, %c0_19, %c0_20], %20 {strides = array<i32>} : memref<3x1x128xf32, #tpu.memory_space<vmem>>, vector<1x1x128xf32>,
    %c2_21 = arith.constant 2 : index
    %c0_22 = arith.constant 0 : index
    %c0_23 = arith.constant 0 : index
    %21 = vector.load %arg4[%c2_21, %c0_22, %c0_23] : memref<3x1x128xf32, #tpu.memory_space<vmem>>, vector<1x1x128xf32>
    %22 = vector.shape_cast %21 : vector<1x1x128xf32> to vector<1x128xf32>
    %23 = vector.shape_cast %14 : vector<1x128xf32> to vector<1x1x128xf32>
    tpu.vector_store %arg4[%c2_21, %c0_22, %c0_23], %23 {strides = array<i32>} : memref<3x1x128xf32, #tpu.memory_space<vmem>>, vector<1x1x128xf32>,
    %24 = arith.mulf %4, %4 : vector<1x128xf32>
    %25 = arith.mulf %9, %9 : vector<1x128xf32>
    %26 = arith.addf %24, %25 : vector<1x128xf32>
    %27 = arith.mulf %14, %14 : vector<1x128xf32>
    %28 = arith.addf %26, %27 : vector<1x128xf32>
    %cst = arith.constant 1.000000e-24 : f32
    %29 = vector.broadcast %cst : f32 to vector<1x128xf32>
    %30 = arith.maximumf %28, %29 : vector<1x128xf32>
    %31 = math.rsqrt %30 : vector<1x128xf32>
    %32 = arith.mulf %4, %31 : vector<1x128xf32>
    %33 = arith.mulf %9, %31 : vector<1x128xf32>
    %34 = arith.mulf %14, %31 : vector<1x128xf32>
    %35 = arith.mulf %32, %32 : vector<1x128xf32>
    %36 = arith.mulf %33, %33 : vector<1x128xf32>
    %37 = arith.mulf %34, %34 : vector<1x128xf32>
    %cst_24 = arith.constant 1.000000e+00 : f32
    %38 = vector.broadcast %cst_24 : f32 to vector<1x128xf32>
    %c0_25 = arith.constant 0 : index
    %c0_26 = arith.constant 0 : index
    %c0_27 = arith.constant 0 : index
    %39 = vector.load %arg3[%c0_25, %c0_26, %c0_27] : memref<9x1x128xf32, #tpu.memory_space<vmem>>, vector<1x1x128xf32>
    %40 = vector.shape_cast %39 : vector<1x1x128xf32> to vector<1x128xf32>
    %41 = vector.shape_cast %38 : vector<1x128xf32> to vector<1x1x128xf32>
    tpu.vector_store %arg3[%c0_25, %c0_26, %c0_27], %41 {strides = array<i32>} : memref<9x1x128xf32, #tpu.memory_space<vmem>>, vector<1x1x128xf32>,
    %cst_28 = arith.constant 1.73205078 : f32
    %42 = vector.broadcast %cst_28 : f32 to vector<1x128xf32>
    %43 = arith.mulf %42, %32 : vector<1x128xf32>
    %c1_29 = arith.constant 1 : index
    %c0_30 = arith.constant 0 : index
    %c0_31 = arith.constant 0 : index
    %44 = vector.load %arg3[%c1_29, %c0_30, %c0_31] : memref<9x1x128xf32, #tpu.memory_space<vmem>>, vector<1x1x128xf32>
    %45 = vector.shape_cast %44 : vector<1x1x128xf32> to vector<1x128xf32>
    %46 = vector.shape_cast %43 : vector<1x128xf32> to vector<1x1x128xf32>
    tpu.vector_store %arg3[%c1_29, %c0_30, %c0_31], %46 {strides = array<i32>} : memref<9x1x128xf32, #tpu.memory_space<vmem>>, vector<1x1x128xf32>,
    %cst_32 = arith.constant 1.73205078 : f32
    %47 = vector.broadcast %cst_32 : f32 to vector<1x128xf32>
    %48 = arith.mulf %47, %33 : vector<1x128xf32>
    %c2_33 = arith.constant 2 : index
    %c0_34 = arith.constant 0 : index
    %c0_35 = arith.constant 0 : index
    %49 = vector.load %arg3[%c2_33, %c0_34, %c0_35] : memref<9x1x128xf32, #tpu.memory_space<vmem>>, vector<1x1x128xf32>
    %50 = vector.shape_cast %49 : vector<1x1x128xf32> to vector<1x128xf32>
    %51 = vector.shape_cast %48 : vector<1x128xf32> to vector<1x1x128xf32>
    tpu.vector_store %arg3[%c2_33, %c0_34, %c0_35], %51 {strides = array<i32>} : memref<9x1x128xf32, #tpu.memory_space<vmem>>, vector<1x1x128xf32>,
    %cst_36 = arith.constant 1.73205078 : f32
    %52 = vector.broadcast %cst_36 : f32 to vector<1x128xf32>
    %53 = arith.mulf %52, %34 : vector<1x128xf32>
    %c3 = arith.constant 3 : index
    %c0_37 = arith.constant 0 : index
    %c0_38 = arith.constant 0 : index
    %54 = vector.load %arg3[%c3, %c0_37, %c0_38] : memref<9x1x128xf32, #tpu.memory_space<vmem>>, vector<1x1x128xf32>
    %55 = vector.shape_cast %54 : vector<1x1x128xf32> to vector<1x128xf32>
    %56 = vector.shape_cast %53 : vector<1x128xf32> to vector<1x1x128xf32>
    tpu.vector_store %arg3[%c3, %c0_37, %c0_38], %56 {strides = array<i32>} : memref<9x1x128xf32, #tpu.memory_space<vmem>>, vector<1x1x128xf32>,
    %cst_39 = arith.constant 3.87298346 : f32
    %57 = vector.broadcast %cst_39 : f32 to vector<1x128xf32>
    %58 = arith.mulf %57, %32 : vector<1x128xf32>
    %59 = arith.mulf %58, %34 : vector<1x128xf32>
    %c4 = arith.constant 4 : index
    %c0_40 = arith.constant 0 : index
    %c0_41 = arith.constant 0 : index
    %60 = vector.load %arg3[%c4, %c0_40, %c0_41] : memref<9x1x128xf32, #tpu.memory_space<vmem>>, vector<1x1x128xf32>
    %61 = vector.shape_cast %60 : vector<1x1x128xf32> to vector<1x128xf32>
    %62 = vector.shape_cast %59 : vector<1x128xf32> to vector<1x1x128xf32>
    tpu.vector_store %arg3[%c4, %c0_40, %c0_41], %62 {strides = array<i32>} : memref<9x1x128xf32, #tpu.memory_space<vmem>>, vector<1x1x128xf32>,
    %cst_42 = arith.constant 3.87298346 : f32
    %63 = vector.broadcast %cst_42 : f32 to vector<1x128xf32>
    %64 = arith.mulf %63, %32 : vector<1x128xf32>
    %65 = arith.mulf %64, %33 : vector<1x128xf32>
    %c5 = arith.constant 5 : index
    %c0_43 = arith.constant 0 : index
    %c0_44 = arith.constant 0 : index
    %66 = vector.load %arg3[%c5, %c0_43, %c0_44] : memref<9x1x128xf32, #tpu.memory_space<vmem>>, vector<1x1x128xf32>
    %67 = vector.shape_cast %66 : vector<1x1x128xf32> to vector<1x128xf32>
    %68 = vector.shape_cast %65 : vector<1x128xf32> to vector<1x1x128xf32>
    tpu.vector_store %arg3[%c5, %c0_43, %c0_44], %68 {strides = array<i32>} : memref<9x1x128xf32, #tpu.memory_space<vmem>>, vector<1x1x128xf32>,
    %69 = arith.addf %35, %37 : vector<1x128xf32>
    %cst_45 = arith.constant 5.000000e-01 : f32
    %70 = vector.broadcast %cst_45 : f32 to vector<1x128xf32>
    %71 = arith.mulf %70, %69 : vector<1x128xf32>
    %72 = arith.subf %36, %71 : vector<1x128xf32>
    %cst_46 = arith.constant 2.23606801 : f32
    %73 = vector.broadcast %cst_46 : f32 to vector<1x128xf32>
    %74 = arith.mulf %73, %72 : vector<1x128xf32>
    %c6 = arith.constant 6 : index
    %c0_47 = arith.constant 0 : index
    %c0_48 = arith.constant 0 : index
    %75 = vector.load %arg3[%c6, %c0_47, %c0_48] : memref<9x1x128xf32, #tpu.memory_space<vmem>>, vector<1x1x128xf32>
    %76 = vector.shape_cast %75 : vector<1x1x128xf32> to vector<1x128xf32>
    %77 = vector.shape_cast %74 : vector<1x128xf32> to vector<1x1x128xf32>
    tpu.vector_store %arg3[%c6, %c0_47, %c0_48], %77 {strides = array<i32>} : memref<9x1x128xf32, #tpu.memory_space<vmem>>, vector<1x1x128xf32>,
    %cst_49 = arith.constant 3.87298346 : f32
    %78 = vector.broadcast %cst_49 : f32 to vector<1x128xf32>
    %79 = arith.mulf %78, %33 : vector<1x128xf32>
    %80 = arith.mulf %79, %34 : vector<1x128xf32>
    %c7 = arith.constant 7 : index
    %c0_50 = arith.constant 0 : index
    %c0_51 = arith.constant 0 : index
    %81 = vector.load %arg3[%c7, %c0_50, %c0_51] : memref<9x1x128xf32, #tpu.memory_space<vmem>>, vector<1x1x128xf32>
    %82 = vector.shape_cast %81 : vector<1x1x128xf32> to vector<1x128xf32>
    %83 = vector.shape_cast %80 : vector<1x128xf32> to vector<1x1x128xf32>
    tpu.vector_store %arg3[%c7, %c0_50, %c0_51], %83 {strides = array<i32>} : memref<9x1x128xf32, #tpu.memory_space<vmem>>, vector<1x1x128xf32>,
    %84 = arith.subf %37, %35 : vector<1x128xf32>
    %cst_52 = arith.constant 1.93649173 : f32
    %85 = vector.broadcast %cst_52 : f32 to vector<1x128xf32>
    %86 = arith.mulf %85, %84 : vector<1x128xf32>
    %c8 = arith.constant 8 : index
    %c0_53 = arith.constant 0 : index
    %c0_54 = arith.constant 0 : index
    %87 = vector.load %arg3[%c8, %c0_53, %c0_54] : memref<9x1x128xf32, #tpu.memory_space<vmem>>, vector<1x1x128xf32>
    %88 = vector.shape_cast %87 : vector<1x1x128xf32> to vector<1x128xf32>
    %89 = vector.shape_cast %86 : vector<1x128xf32> to vector<1x1x128xf32>
    tpu.vector_store %arg3[%c8, %c0_53, %c0_54], %89 {strides = array<i32>} : memref<9x1x128xf32, #tpu.memory_space<vmem>>, vector<1x1x128xf32>,
    return
  }
  func.func @transform_0(%arg0: i32) -> (i32, i32, i32) {
    %c0_i32 = arith.constant 0 : i32
    %c0_i32_0 = arith.constant 0 : i32
    %c0_i32_1 = arith.constant 0 : i32
    return %c0_i32, %arg0, %c0_i32_0 : i32, i32, i32
  }
  func.func @transform_1(%arg0: i32) -> (i32, i32, i32) {
    %c0_i32 = arith.constant 0 : i32
    %c0_i32_0 = arith.constant 0 : i32
    %c0_i32_1 = arith.constant 0 : i32
    return %c0_i32, %arg0, %c0_i32_0 : i32, i32, i32
  }
  func.func @transform_2(%arg0: i32) -> (i32, i32, i32) {
    %c0_i32 = arith.constant 0 : i32
    %c0_i32_0 = arith.constant 0 : i32
    %c0_i32_1 = arith.constant 0 : i32
    return %c0_i32, %arg0, %c0_i32_0 : i32, i32, i32
  }
  func.func @transform_3(%arg0: i32) -> (i32, i32, i32) {
    %c0_i32 = arith.constant 0 : i32
    %c0_i32_0 = arith.constant 0 : i32
    %c0_i32_1 = arith.constant 0 : i32
    return %c0_i32, %arg0, %c0_i32_0 : i32, i32, i32
  }
}

</mosaic_0001>

<llo_original>
// kernel: tpu_custom_call.1
$region0: #{tpu_custom_call.1}
  #allocation0 [shape = 'u32[]', space=smem, size = 0x4, offset = 0x4, fixed_abs, tag = 'smem constant byte address 0x4 - core index']
  #allocation1 [shape = 'u32[144,128]{1,0:T(1,128)}', space=vmem, size = 0x12000, scoped, tag = 'internal scratch']
  %s0 = inlined_call_operand.hbm [shape: f32[3,1,128], index: 0, kind: input, shape index: {}]
  %s1 = inlined_call_operand.vmem [shape: f32[3,1,128], index: 1, kind: input, shape index: {}]
  %s2 = inlined_call_operand.hbm [shape: f32[9,1,128], index: 2, kind: output, shape index: {0}]
  %s3 = inlined_call_operand.hbm [shape: f32[3,1,128], index: 3, kind: output, shape index: {1}]
  %4 = xla_tuple %s2, %s3
  %s5 = sld [smem:[#allocation0]]
  $region30: #{tpu_custom_call.1} parent=0
    _
  %s7 = ssub.s32 1, %s5
  %s8 = scalar_select 0, %s7, %s5
  $region1: #{tpu_custom_call.1} parent=0
    #allocation2 [shape = 'u8[1536]{0}', space=vmem, size = 0x800, scoped, tag = 'input window, operand 0, single buffered']
    #allocation3 [shape = 's32[1]{0}', space=sflag, size = 0x4, scoped, tag = 'scoped memory for tpu_custom_call.1']
    #allocation4 [shape = 's32[1]{0}', space=sflag, size = 0x4, scoped, tag = 'scoped memory for tpu_custom_call.1']
    #allocation5 [shape = 'u8[4608]{0}', space=vmem, size = 0x1400, scoped, tag = 'output window, operand 0, single buffered']
    #allocation6 [shape = 'u8[1536]{0}', space=vmem, size = 0x800, scoped, tag = 'output window, operand 1, single buffered']
    #allocation7 [shape = 's32[1]{0}', space=sflag, size = 0x4, scoped, tag = 'scoped memory for tpu_custom_call.1']
    %9 = vsyncpa [#allocation3], 0
    %10 = vsyncpa [#allocation4], 0
    %11 = vsyncpa [#allocation7], 0
    // Predicated region
    $region2: #{tpu_custom_call.1} parent=1 // pred_check
      _
    $region3: #{tpu_custom_call.1} parent=1 // pred_check_branch
      %13 = sbr.rel (0) target = $region5
    $region4: #{tpu_custom_call.1} parent=1 // pred_region
      %s15 = ssub.s32 48, 48
      %16 = vsyncadd [#allocation3], %s15
      %s17 = sshll.u32 [#allocation2], 4
      %s18 = int_to_ptr.vmem [resolvable:$true] %s17
      %23 = dma.hbm_to_vmem [thread:$0]  %s0, 48, %s18, [#allocation3], 16, 16, 1
    $region5: #{tpu_custom_call.1} parent=1 // pred_fallthru
      _
    // Predicated region
    $region6: #{tpu_custom_call.1} parent=1 // pred_check
      _
    $region7: #{tpu_custom_call.1} parent=1 // pred_check_branch
      %25 = sbr.rel (0) target = $region9
    $region8: #{tpu_custom_call.1} parent=1 // pred_region
      _
    $region9: #{tpu_custom_call.1} parent=1 // pred_fallthru
      _
    // Predicated region
    $region10: #{tpu_custom_call.1} parent=1 // pred_check
      _
    $region11: #{tpu_custom_call.1} parent=1 // pred_check_branch
      %27 = sbr.rel (0) target = $region13
    $region12: #{tpu_custom_call.1} parent=1 // pred_region
      %28 = dma.done [#allocation3], 48
    $region13: #{tpu_custom_call.1} parent=1 // pred_fallthru
      _
    %v29 = vld [vmem:[%s1] sm:$0x1]
    %v30 = vld [vmem:[#allocation2] sm:$0x1]
    %v31 = vsub.f32 %v29, %v30
    %s32 = scalar_lea.vmem %s1, 1
    %v33 = vld [vmem:[%s32] sm:$0x1]
    %s34 = scalar_lea.vmem [#allocation2], 1
    %v35 = vld [vmem:[%s34] sm:$0x1]
    %v36 = vsub.f32 %v33, %v35
    %s37 = scalar_lea.vmem %s1, 2
    %v38 = vld [vmem:[%s37] sm:$0x1]
    %s39 = scalar_lea.vmem [#allocation2], 2
    %v40 = vld [vmem:[%s39] sm:$0x1]
    %v41 = vsub.f32 %v38, %v40
    %42 = vst [vmem:[#allocation6] sm:$0x1] %v31
    %s43 = scalar_lea.vmem [#allocation6], 1
    %44 = vst [vmem:[%s43] sm:$0x1] %v36
    %s45 = scalar_lea.vmem [#allocation6], 2
    %46 = vst [vmem:[%s45] sm:$0x1] %v41
    %v47 = vmul.f32 %v31, %v31
    %v48 = vmul.f32 %v36, %v36
    %v49 = vadd.f32 %v47, %v48
    %v50 = vmul.f32 %v41, %v41
    %v51 = vadd.f32 %v49, %v50
    %v52 = vmax.f32 %v51, 1e-24
    %v53 = vrsqrt.pop %v52
    %v54 = vmul.f32 %v31, %v53
    %v55 = vmul.f32 %v36, %v53
    %v56 = vmul.f32 %v41, %v53
    %v57 = vmul.f32 %v54, %v54
    %v58 = vmul.f32 %v55, %v55
    %v59 = vmul.f32 %v56, %v56
    %60 = vst [vmem:[#allocation5] sm:$0x1] 1.0
    %v61 = vmul.f32 %v54, 1.7320508
    %s62 = scalar_lea.vmem [#allocation5], 1
    %63 = vst [vmem:[%s62] sm:$0x1] %v61
    %v64 = vmul.f32 %v55, 1.7320508
    %s65 = scalar_lea.vmem [#allocation5], 2
    %66 = vst [vmem:[%s65] sm:$0x1] %v64
    %v67 = vmul.f32 %v56, 1.7320508
    %s68 = scalar_lea.vmem [#allocation5], 3
    %69 = vst [vmem:[%s68] sm:$0x1] %v67
    %v70 = vmul.f32 %v54, 3.8729835
    %v71 = vmul.f32 %v70, %v56
    %s72 = scalar_lea.vmem [#allocation5], 4
    %73 = vst [vmem:[%s72] sm:$0x1] %v71
    %v74 = vmul.f32 %v70, %v55
    %s75 = scalar_lea.vmem [#allocation5], 5
    %76 = vst [vmem:[%s75] sm:$0x1] %v74
    %v77 = vadd.f32 %v57, %v59
    %v78 = vmul.f32 %v77, 0.5
    %v79 = vsub.f32 %v58, %v78
    %v80 = vmul.f32 %v79, 2.236068
    %s81 = scalar_lea.vmem [#allocation5], 6
    %82 = vst [vmem:[%s81] sm:$0x1] %v80
    %v83 = vmul.f32 %v55, 3.8729835
    %v84 = vmul.f32 %v83, %v56
    %s85 = scalar_lea.vmem [#allocation5], 7
    %86 = vst [vmem:[%s85] sm:$0x1] %v84
    %v87 = vsub.f32 %v59, %v57
    %v88 = vmul.f32 %v87, 1.9364917
    %s89 = scalar_lea.vmem [#allocation5], 8
    %90 = vst [vmem:[%s89] sm:$0x1] %v88
    // Predicated region
    $region14: #{tpu_custom_call.1} parent=1 // pred_check
      _
    $region15: #{tpu_custom_call.1} parent=1 // pred_check_branch
      %92 = sbr.rel (0) target = $region17
    $region16: #{tpu_custom_call.1} parent=1 // pred_region
      %s94 = ssub.s32 144, 144
      %95 = vsyncadd [#allocation4], %s94
      %s96 = sshll.u32 [#allocation5], 4
      %s97 = int_to_ptr.vmem [resolvable:$true] %s96
      %102 = dma.vmem_to_hbm [thread:$0]  %s97, 144, %s2, [#allocation4], 16, 16, 1
    $region17: #{tpu_custom_call.1} parent=1 // pred_fallthru
      _
    // Predicated region
    $region18: #{tpu_custom_call.1} parent=1 // pred_check
      _
    $region19: #{tpu_custom_call.1} parent=1 // pred_check_branch
      %104 = sbr.rel (0) target = $region21
    $region20: #{tpu_custom_call.1} parent=1 // pred_region
      %s106 = ssub.s32 48, 48
      %107 = vsyncadd [#allocation7], %s106
      %s108 = sshll.u32 [#allocation6], 4
      %s109 = int_to_ptr.vmem [resolvable:$true] %s108
      %114 = dma.vmem_to_hbm [thread:$0]  %s109, 48, %s3, [#allocation7], 16, 16, 1
    $region21: #{tpu_custom_call.1} parent=1 // pred_fallthru
      _
    // Predicated region
    $region22: #{tpu_custom_call.1} parent=1 // pred_check
      _
    $region23: #{tpu_custom_call.1} parent=1 // pred_check_branch
      %116 = sbr.rel (0) target = $region25
    $region24: #{tpu_custom_call.1} parent=1 // pred_region
      %117 = dma.done [#allocation4], 144
    $region25: #{tpu_custom_call.1} parent=1 // pred_fallthru
      _
    // Predicated region
    $region26: #{tpu_custom_call.1} parent=1 // pred_check
      _
    $region27: #{tpu_custom_call.1} parent=1 // pred_check_branch
      %119 = sbr.rel (0) target = $region29
    $region28: #{tpu_custom_call.1} parent=1 // pred_region
      %120 = dma.done [#allocation7], 48
    $region29: #{tpu_custom_call.1} parent=1 // pred_fallthru
      _
    %121 = vsyncpa [#allocation3], 1
    %122 = vsyncpa [#allocation4], 1
    %123 = vsyncpa [#allocation7], 1

</llo_original>
